<compile_context>
chip_gen: v7x
topology: tpu7x:2x2x1
jax: 0.10.0
libtpu: 0.0.40
codegen_flags: <defaults>
</compile_context>

<pallas_src>
import jax
import jax.numpy as jnp
from jax.experimental import pallas as pl
from jax.experimental.pallas import tpu as pltpu

LANE = 128      # lane width (batch elements per vreg row)
SUB = 8         # sublane quantum
HID = 10        # hidden width of layer1 / layer2
IN_F = 2        # input features
TB_MAX = 4096   # max batch lanes per grid step (multiple of 128)

# Column layout of the packed (16, 128) weight operand (rows = hidden units,
# zero-padded to 16 sublanes; unused lanes stay zero):
_C_W1X0 = 0            # w1[:, 0]
_C_W1X1 = 1            # w1[:, 1]
_C_B1 = 2              # b1
_C_W2 = 3              # columns 3 .. 12 : column 3+k holds w2[:, k]
_C_B2 = 3 + HID        # 13 : b2
_C_W3 = 4 + HID        # 14 : w3[0, :]
_C_B3 = 5 + HID        # 15 : b3 in row 0 only


def _mlp_kernel(xt_ref, w_ref, o_ref):
    # xt_ref: (2, TB)    features on sublanes, batch on lanes
    # w_ref : (16, 128)  packed per-sublane weight columns
    # o_ref : (1, TB)    lane-dense output row
    x0 = xt_ref[0:1, :]                                   # (1, TB)
    x1 = xt_ref[1:2, :]                                   # (1, TB)

    w1c0 = w_ref[:, _C_W1X0:_C_W1X0 + 1]                  # (16, 1)
    w1c1 = w_ref[:, _C_W1X1:_C_W1X1 + 1]
    b1c = w_ref[:, _C_B1:_C_B1 + 1]
    b2c = w_ref[:, _C_B2:_C_B2 + 1]
    w3c = w_ref[:, _C_W3:_C_W3 + 1]
    b3c = w_ref[:, _C_B3:_C_B3 + 1]                       # b3 in row 0 only

    # Layer 1: two lane-wide FMAs + relu; 10 real hidden units on sublanes.
    # Zero-padded sublane rows stay exactly zero through the relu.
    h1 = jnp.maximum(x0 * w1c0 + x1 * w1c1 + b1c, 0.0)    # (16, TB)

    # Layer 2: 10 full-vreg FMAs into two partial accumulators (tree sum
    # shortens the dependent-add chain vs. a single 9-deep accumulator).
    acc0 = w_ref[:, _C_W2 + 0:_C_W2 + 1] * h1[0:1, :]
    acc1 = w_ref[:, _C_W2 + 1:_C_W2 + 2] * h1[1:2, :]
    for k in range(2, HID, 2):
        acc0 = acc0 + w_ref[:, _C_W2 + k:_C_W2 + k + 1] * h1[k:k + 1, :]
        acc1 = acc1 + w_ref[:, _C_W2 + k + 1:_C_W2 + k + 2] * h1[k + 1:k + 2, :]
    h2 = jnp.maximum(acc0 + acc1 + b2c, 0.0)              # (16, TB)

    # Layer 3 (10 -> 1): per-sublane scale then sublane (XLU) reduce; b3 is
    # added exactly once per lane via row 0 of b3c. Output store is lane-dense.
    o_ref[...] = jnp.sum(h2 * w3c + b3c, axis=0, keepdims=True)   # (1, TB)


def pack_params(params):
    """One-time packing of PyTorch-layout params into the (16, 128) operand."""
    w1, b1, w2, b2, w3, b3 = (jnp.asarray(p, jnp.float32) for p in params)
    w = jnp.zeros((2 * SUB, LANE), jnp.float32)
    w = w.at[0:HID, _C_W1X0].set(w1[:, 0])
    w = w.at[0:HID, _C_W1X1].set(w1[:, 1])
    w = w.at[0:HID, _C_B1].set(b1)
    w = w.at[0:HID, _C_W2:_C_W2 + HID].set(w2)   # w[j, 3+k] = w2[j, k]
    w = w.at[0:HID, _C_B2].set(b2)
    w = w.at[0:HID, _C_W3].set(w3[0])
    w = w.at[0, _C_B3].set(b3[0])
    return w


def _round_up(v, m):
    return ((v + m - 1) // m) * m


def _choose_tile(n):
    """Pick (tile_lanes, padded_lanes). >=2 grid steps for non-tiny batches so
    both v7x TensorCores get work; neutral on single-TC v5e/v6e."""
    n_pad = max(LANE, _round_up(n, LANE))
    if n_pad <= LANE:                       # tiny batch: one 128-lane step
        return n_pad, n_pad
    steps = max(2, -(-n_pad // TB_MAX))
    tb = min(TB_MAX, _round_up(-(-n_pad // steps), LANE))
    return tb, _round_up(n_pad, tb)


@jax.jit
def make_moons_forward(x, w_packed):
    """x: (N, 2) float32 -> (N, 1) float32, matching the PyTorch forward."""
    n = x.shape[0]
    tb, n_pad = _choose_tile(n)

    # Layout plumbing only: present the batch on lanes.
    xt = jnp.zeros((IN_F, n_pad), jnp.float32).at[:, :n].set(
        x.astype(jnp.float32).T)

    out = pl.pallas_call(
        _mlp_kernel,
        out_shape=jax.ShapeDtypeStruct((1, n_pad), jnp.float32),
        grid=(n_pad // tb,),
        in_specs=[
            pl.BlockSpec((IN_F, tb), lambda i: (0, i)),      # x tile (2, tb)
            pl.BlockSpec((2 * SUB, LANE), lambda i: (0, 0)),  # packed weights
        ],
        out_specs=pl.BlockSpec((1, tb), lambda i: (0, i)),   # lane-dense output
        compiler_params=pltpu.CompilerParams(
            dimension_semantics=("parallel",)),
    )(xt, w_packed)

    return out[0, :n][:, None]


def init_params(key):
    """PyTorch nn.Linear default init: U(-1/sqrt(fan_in), +1/sqrt(fan_in))."""
    def linear(key, fan_in, fan_out):
        kw, kb = jax.random.split(key)
        bound = 1.0 / jnp.sqrt(fan_in)
        w = jax.random.uniform(kw, (fan_out, fan_in), jnp.float32, -bound, bound)
        b = jax.random.uniform(kb, (fan_out,), jnp.float32, -bound, bound)
        return w, b

    k1, k2, k3 = jax.random.split(key, 3)
    w1, b1 = linear(k1, 2, 10)
    w2, b2 = linear(k2, 10, 10)
    w3, b3 = linear(k3, 10, 1)
    return (w1, b1, w2, b2, w3, b3)


def _reference(x, params):
    w1, b1, w2, b2, w3, b3 = params
    hp = jax.lax.Precision.HIGHEST
    h = jnp.maximum(jnp.dot(x, w1.T, precision=hp) + b1, 0.0)
    h = jnp.maximum(jnp.dot(h, w2.T, precision=hp) + b2, 0.0)
    return jnp.dot(h, w3.T, precision=hp) + b3


if __name__ == "__main__":
    key = jax.random.PRNGKey(0)
    kx, kx2, kp = jax.random.split(key, 3)
    params = init_params(kp)
    w_packed = pack_params(params)   # pack/pad weights ONCE, outside the forward

    # make_moons-scale input: (batch=8, features=2) -> single 128-lane grid step
    x = jax.random.normal(kx, (8, 2), jnp.float32)
    y = jax.block_until_ready(make_moons_forward(x, w_packed))
    assert y.shape == (8, 1)
    assert jnp.allclose(y, _reference(x, params), atol=1e-5, rtol=1e-5)

    # larger batch exercising the multi-step (2 parallel grid steps) + padding path
    x2 = jax.random.normal(kx2, (1000, 2), jnp.float32)
    y2 = jax.block_until_ready(make_moons_forward(x2, w_packed))
    assert y2.shape == (1000, 1)
    assert jnp.allclose(y2, _reference(x2, params), atol=1e-5, rtol=1e-5)

    print("KERNEL_OK")
</pallas_src>

<mosaic_0001>
module attributes {stable_mosaic.version = 11 : i64} {
  func.func @_mlp_kernel(%arg0: i32, %arg1: memref<2x128xf32, #tpu.memory_space<vmem>>, %arg2: memref<16x128xf32, #tpu.memory_space<vmem>>, %arg3: memref<1x128xf32, #tpu.memory_space<vmem>>) attributes {dimension_semantics = [#tpu.dimension_semantics<parallel>], iteration_bounds = array<i64: 1>, scalar_prefetch = 0 : i64, scratch_operands = 0 : i64, tpu.core_type = #tpu.core_type<tc>, window_params = [{transform_indices = @transform_0, window_bounds = array<i64: 2, 128>}, {pipeline_mode = #tpu.pipeline_mode<synchronous>, transform_indices = @transform_1, window_bounds = array<i64: 16, 128>}, {transform_indices = @transform_2, window_bounds = array<i64: 1, 128>}]} {
    %c0 = arith.constant 0 : index
    %c0_0 = arith.constant 0 : index
    %0 = vector.load %arg1[%c0, %c0_0] : memref<2x128xf32, #tpu.memory_space<vmem>>, vector<1x128xf32>
    %c1 = arith.constant 1 : index
    %c0_1 = arith.constant 0 : index
    %1 = vector.load %arg1[%c1, %c0_1] : memref<2x128xf32, #tpu.memory_space<vmem>>, vector<1x128xf32>
    %c0_2 = arith.constant 0 : index
    %c0_3 = arith.constant 0 : index
    %2 = vector.load %arg2[%c0_2, %c0_3] : memref<16x128xf32, #tpu.memory_space<vmem>>, vector<16x1xf32>
    %c0_4 = arith.constant 0 : index
    %c1_5 = arith.constant 1 : index
    %3 = vector.load %arg2[%c0_4, %c1_5] : memref<16x128xf32, #tpu.memory_space<vmem>>, vector<16x1xf32>
    %c0_6 = arith.constant 0 : index
    %c2 = arith.constant 2 : index
    %4 = vector.load %arg2[%c0_6, %c2] : memref<16x128xf32, #tpu.memory_space<vmem>>, vector<16x1xf32>
    %c0_7 = arith.constant 0 : index
    %c13 = arith.constant 13 : index
    %5 = vector.load %arg2[%c0_7, %c13] : memref<16x128xf32, #tpu.memory_space<vmem>>, vector<16x1xf32>
    %c0_8 = arith.constant 0 : index
    %c14 = arith.constant 14 : index
    %6 = vector.load %arg2[%c0_8, %c14] : memref<16x128xf32, #tpu.memory_space<vmem>>, vector<16x1xf32>
    %c0_9 = arith.constant 0 : index
    %c15 = arith.constant 15 : index
    %7 = vector.load %arg2[%c0_9, %c15] : memref<16x128xf32, #tpu.memory_space<vmem>>, vector<16x1xf32>
    %8 = vector.broadcast %0 : vector<1x128xf32> to vector<16x128xf32>
    %9 = vector.broadcast %2 : vector<16x1xf32> to vector<16x128xf32>
    %10 = arith.mulf %8, %9 : vector<16x128xf32>
    %11 = vector.broadcast %1 : vector<1x128xf32> to vector<16x128xf32>
    %12 = vector.broadcast %3 : vector<16x1xf32> to vector<16x128xf32>
    %13 = arith.mulf %11, %12 : vector<16x128xf32>
    %14 = arith.addf %10, %13 : vector<16x128xf32>
    %15 = vector.broadcast %4 : vector<16x1xf32> to vector<16x128xf32>
    %16 = arith.addf %14, %15 : vector<16x128xf32>
    %cst = arith.constant 0.000000e+00 : f32
    %17 = vector.broadcast %cst : f32 to vector<16x128xf32>
    %18 = arith.maximumf %16, %17 : vector<16x128xf32>
    %c0_10 = arith.constant 0 : index
    %c3 = arith.constant 3 : index
    %19 = vector.load %arg2[%c0_10, %c3] : memref<16x128xf32, #tpu.memory_space<vmem>>, vector<16x1xf32>
    %20 = vector.extract_strided_slice %18 {offsets = [0, 0], sizes = [1, 128], strides = [1, 1]} : vector<16x128xf32> to vector<1x128xf32>
    %21 = vector.broadcast %19 : vector<16x1xf32> to vector<16x128xf32>
    %22 = vector.broadcast %20 : vector<1x128xf32> to vector<16x128xf32>
    %23 = arith.mulf %21, %22 : vector<16x128xf32>
    %c0_11 = arith.constant 0 : index
    %c4 = arith.constant 4 : index
    %24 = vector.load %arg2[%c0_11, %c4] : memref<16x128xf32, #tpu.memory_space<vmem>>, vector<16x1xf32>
    %25 = vector.extract_strided_slice %18 {offsets = [1, 0], sizes = [1, 128], strides = [1, 1]} : vector<16x128xf32> to vector<1x128xf32>
    %26 = vector.broadcast %24 : vector<16x1xf32> to vector<16x128xf32>
    %27 = vector.broadcast %25 : vector<1x128xf32> to vector<16x128xf32>
    %28 = arith.mulf %26, %27 : vector<16x128xf32>
    %c0_12 = arith.constant 0 : index
    %c5 = arith.constant 5 : index
    %29 = vector.load %arg2[%c0_12, %c5] : memref<16x128xf32, #tpu.memory_space<vmem>>, vector<16x1xf32>
    %30 = vector.extract_strided_slice %18 {offsets = [2, 0], sizes = [1, 128], strides = [1, 1]} : vector<16x128xf32> to vector<1x128xf32>
    %31 = vector.broadcast %29 : vector<16x1xf32> to vector<16x128xf32>
    %32 = vector.broadcast %30 : vector<1x128xf32> to vector<16x128xf32>
    %33 = arith.mulf %31, %32 : vector<16x128xf32>
    %34 = arith.addf %23, %33 : vector<16x128xf32>
    %c0_13 = arith.constant 0 : index
    %c6 = arith.constant 6 : index
    %35 = vector.load %arg2[%c0_13, %c6] : memref<16x128xf32, #tpu.memory_space<vmem>>, vector<16x1xf32>
    %36 = vector.extract_strided_slice %18 {offsets = [3, 0], sizes = [1, 128], strides = [1, 1]} : vector<16x128xf32> to vector<1x128xf32>
    %37 = vector.broadcast %35 : vector<16x1xf32> to vector<16x128xf32>
    %38 = vector.broadcast %36 : vector<1x128xf32> to vector<16x128xf32>
    %39 = arith.mulf %37, %38 : vector<16x128xf32>
    %40 = arith.addf %28, %39 : vector<16x128xf32>
    %c0_14 = arith.constant 0 : index
    %c7 = arith.constant 7 : index
    %41 = vector.load %arg2[%c0_14, %c7] : memref<16x128xf32, #tpu.memory_space<vmem>>, vector<16x1xf32>
    %42 = vector.extract_strided_slice %18 {offsets = [4, 0], sizes = [1, 128], strides = [1, 1]} : vector<16x128xf32> to vector<1x128xf32>
    %43 = vector.broadcast %41 : vector<16x1xf32> to vector<16x128xf32>
    %44 = vector.broadcast %42 : vector<1x128xf32> to vector<16x128xf32>
    %45 = arith.mulf %43, %44 : vector<16x128xf32>
    %46 = arith.addf %34, %45 : vector<16x128xf32>
    %c0_15 = arith.constant 0 : index
    %c8 = arith.constant 8 : index
    %47 = vector.load %arg2[%c0_15, %c8] : memref<16x128xf32, #tpu.memory_space<vmem>>, vector<16x1xf32>
    %48 = vector.extract_strided_slice %18 {offsets = [5, 0], sizes = [1, 128], strides = [1, 1]} : vector<16x128xf32> to vector<1x128xf32>
    %49 = vector.broadcast %47 : vector<16x1xf32> to vector<16x128xf32>
    %50 = vector.broadcast %48 : vector<1x128xf32> to vector<16x128xf32>
    %51 = arith.mulf %49, %50 : vector<16x128xf32>
    %52 = arith.addf %40, %51 : vector<16x128xf32>
    %c0_16 = arith.constant 0 : index
    %c9 = arith.constant 9 : index
    %53 = vector.load %arg2[%c0_16, %c9] : memref<16x128xf32, #tpu.memory_space<vmem>>, vector<16x1xf32>
    %54 = vector.extract_strided_slice %18 {offsets = [6, 0], sizes = [1, 128], strides = [1, 1]} : vector<16x128xf32> to vector<1x128xf32>
    %55 = vector.broadcast %53 : vector<16x1xf32> to vector<16x128xf32>
    %56 = vector.broadcast %54 : vector<1x128xf32> to vector<16x128xf32>
    %57 = arith.mulf %55, %56 : vector<16x128xf32>
    %58 = arith.addf %46, %57 : vector<16x128xf32>
    %c0_17 = arith.constant 0 : index
    %c10 = arith.constant 10 : index
    %59 = vector.load %arg2[%c0_17, %c10] : memref<16x128xf32, #tpu.memory_space<vmem>>, vector<16x1xf32>
    %60 = vector.extract_strided_slice %18 {offsets = [7, 0], sizes = [1, 128], strides = [1, 1]} : vector<16x128xf32> to vector<1x128xf32>
    %61 = vector.broadcast %59 : vector<16x1xf32> to vector<16x128xf32>
    %62 = vector.broadcast %60 : vector<1x128xf32> to vector<16x128xf32>
    %63 = arith.mulf %61, %62 : vector<16x128xf32>
    %64 = arith.addf %52, %63 : vector<16x128xf32>
    %c0_18 = arith.constant 0 : index
    %c11 = arith.constant 11 : index
    %65 = vector.load %arg2[%c0_18, %c11] : memref<16x128xf32, #tpu.memory_space<vmem>>, vector<16x1xf32>
    %66 = vector.extract_strided_slice %18 {offsets = [8, 0], sizes = [1, 128], strides = [1, 1]} : vector<16x128xf32> to vector<1x128xf32>
    %67 = vector.broadcast %65 : vector<16x1xf32> to vector<16x128xf32>
    %68 = vector.broadcast %66 : vector<1x128xf32> to vector<16x128xf32>
    %69 = arith.mulf %67, %68 : vector<16x128xf32>
    %70 = arith.addf %58, %69 : vector<16x128xf32>
    %c0_19 = arith.constant 0 : index
    %c12 = arith.constant 12 : index
    %71 = vector.load %arg2[%c0_19, %c12] : memref<16x128xf32, #tpu.memory_space<vmem>>, vector<16x1xf32>
    %72 = vector.extract_strided_slice %18 {offsets = [9, 0], sizes = [1, 128], strides = [1, 1]} : vector<16x128xf32> to vector<1x128xf32>
    %73 = vector.broadcast %71 : vector<16x1xf32> to vector<16x128xf32>
    %74 = vector.broadcast %72 : vector<1x128xf32> to vector<16x128xf32>
    %75 = arith.mulf %73, %74 : vector<16x128xf32>
    %76 = arith.addf %64, %75 : vector<16x128xf32>
    %77 = arith.addf %70, %76 : vector<16x128xf32>
    %78 = vector.broadcast %5 : vector<16x1xf32> to vector<16x128xf32>
    %79 = arith.addf %77, %78 : vector<16x128xf32>
    %cst_20 = arith.constant 0.000000e+00 : f32
    %80 = vector.broadcast %cst_20 : f32 to vector<16x128xf32>
    %81 = arith.maximumf %79, %80 : vector<16x128xf32>
    %82 = vector.broadcast %6 : vector<16x1xf32> to vector<16x128xf32>
    %83 = arith.mulf %81, %82 : vector<16x128xf32>
    %84 = vector.broadcast %7 : vector<16x1xf32> to vector<16x128xf32>
    %85 = arith.addf %83, %84 : vector<16x128xf32>
    %cst_21 = arith.constant dense<0.000000e+00> : vector<128xf32>
    %86 = vector.multi_reduction <add>, %85, %cst_21 [0] : vector<16x128xf32> to vector<128xf32>
    %87 = vector.shape_cast %86 : vector<128xf32> to vector<1x128xf32>
    %c0_22 = arith.constant 0 : index
    %c0_23 = arith.constant 0 : index
    %88 = vector.load %arg3[%c0_22, %c0_23] : memref<1x128xf32, #tpu.memory_space<vmem>>, vector<1x128xf32>
    tpu.vector_store %arg3[%c0_22, %c0_23], %87 {strides = array<i32>} : memref<1x128xf32, #tpu.memory_space<vmem>>, vector<1x128xf32>,
    return
  }
  func.func @transform_0(%arg0: i32) -> (i32, i32) {
    %c0_i32 = arith.constant 0 : i32
    %c0_i32_0 = arith.constant 0 : i32
    return %c0_i32, %arg0 : i32, i32
  }
  func.func @transform_1(%arg0: i32) -> (i32, i32) {
    %c0_i32 = arith.constant 0 : i32
    %c0_i32_0 = arith.constant 0 : i32
    %c0_i32_1 = arith.constant 0 : i32
    return %c0_i32, %c0_i32_0 : i32, i32
  }
  func.func @transform_2(%arg0: i32) -> (i32, i32) {
    %c0_i32 = arith.constant 0 : i32
    %c0_i32_0 = arith.constant 0 : i32
    return %c0_i32, %arg0 : i32, i32
  }
}

</mosaic_0001>

<llo_original>
// kernel: make_moons_forward.1
$region0: #{make_moons_forward.1}
  #allocation0 [shape = 'u32[]', space=smem, size = 0x4, offset = 0x4, fixed_abs, tag = 'smem constant byte address 0x4 - core index']
  #allocation1 [shape = 'u32[144,128]{1,0:T(1,128)}', space=vmem, size = 0x12000, scoped, tag = 'internal scratch']
  %s0 = inlined_call_operand.vmem [shape: f32[2,128], index: 0, kind: input, shape index: {}]
  %s1 = inlined_call_operand.vmem [shape: f32[16,128], index: 1, kind: input, shape index: {}]
  %s2 = inlined_call_operand.vmem [shape: f32[1,128], index: 2, kind: output, shape index: {}]
  %s3 = sld [smem:[#allocation0]]
  $region18: #{make_moons_forward.1} parent=0
    _
  %s5 = ssub.s32 1, %s3
  %s6 = scalar_select 0, %s5, %s3
  // Predicated region
  $region2: #{make_moons_forward.1} parent=0 // pred_check
    _
  $region3: #{make_moons_forward.1} parent=0 // pred_check_branch
    %8 = sbr.rel (0) target = $region5
  $region4: #{make_moons_forward.1} parent=0 // pred_region
    _
  $region5: #{make_moons_forward.1} parent=0 // pred_fallthru
    _
  // Predicated region
  $region6: #{make_moons_forward.1} parent=0 // pred_check
    _
  $region7: #{make_moons_forward.1} parent=0 // pred_check_branch
    %10 = sbr.rel (0) target = $region9
  $region8: #{make_moons_forward.1} parent=0 // pred_region
    _
  $region9: #{make_moons_forward.1} parent=0 // pred_fallthru
    _
  %v11 = vld [vmem:[%s0] sm:$0x1]
  %v12 = vld [vmem:[%s0 + $0x1] sm:$0x1]
  %v13 = vld [vmem:[%s1] sm:$0xff]
  %v14 = vld [vmem:[%s1 + $0x8] sm:$0xff]
  %v15 = vlaneseq
  %v16 = vshrl.u32 %v15, 7
  %v17 = vsub.s32 0, %v16
  %v18 = vrot.slane %v11, %v17
  %20 = vset.pattern.permute.xlu0 0
  %21 = vperm.xlu0 %20, %v13
  %v22 = vpop.permute.xlu0 %21
  %25 = vset.pattern.permute.xlu0 0
  %26 = vperm.xlu0 %25, %v14
  %v27 = vpop.permute.xlu0 %26
  %v29 = vmul.f32 %v18, %v22
  %v30 = vmul.f32 %v18, %v27
  %v31 = vlaneseq
  %v32 = vshrl.u32 %v31, 7
  %v33 = vsub.s32 0, %v32
  %v34 = vrot.slane %v12, %v33
  %35 = vset.pattern.permute.xlu0 1
  %36 = vperm.xlu0 %35, %v13
  %v37 = vpop.permute.xlu0 %36
  %39 = vset.pattern.permute.xlu0 1
  %40 = vperm.xlu0 %39, %v14
  %v41 = vpop.permute.xlu0 %40
  %v43 = vmul.f32 %v34, %v37
  %v44 = vmul.f32 %v34, %v41
  %v45 = vadd.f32 %v29, %v43
  %v46 = vadd.f32 %v30, %v44
  %47 = vset.pattern.permute.xlu0 2
  %48 = vperm.xlu0 %47, %v13
  %v49 = vpop.permute.xlu0 %48
  %51 = vset.pattern.permute.xlu0 2
  %52 = vperm.xlu0 %51, %v14
  %v53 = vpop.permute.xlu0 %52
  %v55 = vadd.f32 %v45, %v49
  %v56 = vadd.f32 %v46, %v53
  %v57 = vmax.f32 %v55, 0.0
  %v58 = vmax.f32 %v56, 0.0
  %59 = vset.pattern.permute.xlu0 3
  %60 = vperm.xlu0 %59, %v13
  %v61 = vpop.permute.xlu0 %60
  %63 = vset.pattern.permute.xlu0 3
  %64 = vperm.xlu0 %63, %v14
  %v65 = vpop.permute.xlu0 %64
  %v67 = vlaneseq
  %v68 = vshrl.u32 %v67, 7
  %v69 = vsub.s32 0, %v68
  %v70 = vrot.slane %v57, %v69
  %v71 = vmul.f32 %v61, %v70
  %v72 = vmul.f32 %v65, %v70
  %73 = vset.pattern.permute.xlu0 4
  %74 = vperm.xlu0 %73, %v13
  %v75 = vpop.permute.xlu0 %74
  %77 = vset.pattern.permute.xlu0 4
  %78 = vperm.xlu0 %77, %v14
  %v79 = vpop.permute.xlu0 %78
  %v81 = vlaneseq
  %v82 = vshrl.u32 %v81, 7
  %v83 = vsub.s32 1, %v82
  %v84 = vrot.slane %v57, %v83
  %v85 = vmul.f32 %v75, %v84
  %v86 = vmul.f32 %v79, %v84
  %87 = vset.pattern.permute.xlu0 5
  %88 = vperm.xlu0 %87, %v13
  %v89 = vpop.permute.xlu0 %88
  %91 = vset.pattern.permute.xlu0 5
  %92 = vperm.xlu0 %91, %v14
  %v93 = vpop.permute.xlu0 %92
  %v95 = vlaneseq
  %v96 = vshrl.u32 %v95, 7
  %v97 = vsub.s32 2, %v96
  %v98 = vrot.slane %v57, %v97
  %v99 = vmul.f32 %v89, %v98
  %v100 = vmul.f32 %v93, %v98
  %v101 = vadd.f32 %v71, %v99
  %v102 = vadd.f32 %v72, %v100
  %103 = vset.pattern.permute.xlu0 6
  %104 = vperm.xlu0 %103, %v13
  %v105 = vpop.permute.xlu0 %104
  %107 = vset.pattern.permute.xlu0 6
  %108 = vperm.xlu0 %107, %v14
  %v109 = vpop.permute.xlu0 %108
  %v111 = vlaneseq
  %v112 = vshrl.u32 %v111, 7
  %v113 = vsub.s32 3, %v112
  %v114 = vrot.slane %v57, %v113
  %v115 = vmul.f32 %v105, %v114
  %v116 = vmul.f32 %v109, %v114
  %v117 = vadd.f32 %v85, %v115
  %v118 = vadd.f32 %v86, %v116
  %119 = vset.pattern.permute.xlu0 7
  %120 = vperm.xlu0 %119, %v13
  %v121 = vpop.permute.xlu0 %120
  %123 = vset.pattern.permute.xlu0 7
  %124 = vperm.xlu0 %123, %v14
  %v125 = vpop.permute.xlu0 %124
  %v127 = vlaneseq
  %v128 = vshrl.u32 %v127, 7
  %v129 = vsub.s32 4, %v128
  %v130 = vrot.slane %v57, %v129
  %v131 = vmul.f32 %v121, %v130
  %v132 = vmul.f32 %v125, %v130
  %v133 = vadd.f32 %v101, %v131
  %v134 = vadd.f32 %v102, %v132
  %135 = vset.pattern.permute.xlu0 8
  %136 = vperm.xlu0 %135, %v13
  %v137 = vpop.permute.xlu0 %136
  %139 = vset.pattern.permute.xlu0 8
  %140 = vperm.xlu0 %139, %v14
  %v141 = vpop.permute.xlu0 %140
  %v143 = vlaneseq
  %v144 = vshrl.u32 %v143, 7
  %v145 = vsub.s32 5, %v144
  %v146 = vrot.slane %v57, %v145
  %v147 = vmul.f32 %v137, %v146
  %v148 = vmul.f32 %v141, %v146
  %v149 = vadd.f32 %v117, %v147
  %v150 = vadd.f32 %v118, %v148
  %151 = vset.pattern.permute.xlu0 9
  %152 = vperm.xlu0 %151, %v13
  %v153 = vpop.permute.xlu0 %152
  %155 = vset.pattern.permute.xlu0 9
  %156 = vperm.xlu0 %155, %v14
  %v157 = vpop.permute.xlu0 %156
  %v159 = vlaneseq
  %v160 = vshrl.u32 %v159, 7
  %v161 = vsub.s32 6, %v160
  %v162 = vrot.slane %v57, %v161
  %v163 = vmul.f32 %v153, %v162
  %v164 = vmul.f32 %v157, %v162
  %v165 = vadd.f32 %v133, %v163
  %v166 = vadd.f32 %v134, %v164
  %167 = vset.pattern.permute.xlu0 10
  %168 = vperm.xlu0 %167, %v13
  %v169 = vpop.permute.xlu0 %168
  %171 = vset.pattern.permute.xlu0 10
  %172 = vperm.xlu0 %171, %v14
  %v173 = vpop.permute.xlu0 %172
  %v175 = vlaneseq
  %v176 = vshrl.u32 %v175, 7
  %v177 = vsub.s32 7, %v176
  %v178 = vrot.slane %v57, %v177
  %v179 = vmul.f32 %v169, %v178
  %v180 = vmul.f32 %v173, %v178
  %v181 = vadd.f32 %v149, %v179
  %v182 = vadd.f32 %v150, %v180
  %183 = vset.pattern.permute.xlu0 11
  %184 = vperm.xlu0 %183, %v13
  %v185 = vpop.permute.xlu0 %184
  %187 = vset.pattern.permute.xlu0 11
  %188 = vperm.xlu0 %187, %v14
  %v189 = vpop.permute.xlu0 %188
  %v191 = vlaneseq
  %v192 = vshrl.u32 %v191, 7
  %v193 = vsub.s32 0, %v192
  %v194 = vrot.slane %v58, %v193
  %v195 = vmul.f32 %v185, %v194
  %v196 = vmul.f32 %v189, %v194
  %v197 = vadd.f32 %v165, %v195
  %v198 = vadd.f32 %v166, %v196
  %199 = vset.pattern.permute.xlu0 12
  %200 = vperm.xlu0 %199, %v13
  %v201 = vpop.permute.xlu0 %200
  %203 = vset.pattern.permute.xlu0 12
  %204 = vperm.xlu0 %203, %v14
  %v205 = vpop.permute.xlu0 %204
  %v207 = vlaneseq
  %v208 = vshrl.u32 %v207, 7
  %v209 = vsub.s32 1, %v208
  %v210 = vrot.slane %v58, %v209
  %v211 = vmul.f32 %v201, %v210
  %v212 = vmul.f32 %v205, %v210
  %v213 = vadd.f32 %v181, %v211
  %v214 = vadd.f32 %v182, %v212
  %v215 = vadd.f32 %v197, %v213
  %v216 = vadd.f32 %v198, %v214
  %217 = vset.pattern.permute.xlu0 13
  %218 = vperm.xlu0 %217, %v13
  %v219 = vpop.permute.xlu0 %218
  %221 = vset.pattern.permute.xlu0 13
  %222 = vperm.xlu0 %221, %v14
  %v223 = vpop.permute.xlu0 %222
  %v225 = vadd.f32 %v215, %v219
  %v226 = vadd.f32 %v216, %v223
  %v227 = vmax.f32 %v225, 0.0
  %v228 = vmax.f32 %v226, 0.0
  %229 = vset.pattern.permute.xlu0 14
  %230 = vperm.xlu0 %229, %v13
  %v231 = vpop.permute.xlu0 %230
  %233 = vset.pattern.permute.xlu0 14
  %234 = vperm.xlu0 %233, %v14
  %v235 = vpop.permute.xlu0 %234
  %v237 = vmul.f32 %v227, %v231
  %v238 = vmul.f32 %v228, %v235
  %239 = vset.pattern.permute.xlu0 15
  %240 = vperm.xlu0 %239, %v13
  %v241 = vpop.permute.xlu0 %240
  %243 = vset.pattern.permute.xlu0 15
  %244 = vperm.xlu0 %243, %v14
  %v245 = vpop.permute.xlu0 %244
  %v247 = vadd.f32 %v237, %v241
  %v248 = vadd.f32 %v238, %v245
  %v249 = vadd.f32 %v247, %v248
  %v250 = vrot.slane %v249, 4
  %v251 = vadd.f32 %v249, %v250
  %v252 = vrot.slane %v251, 2
  %v253 = vadd.f32 %v251, %v252
  %v254 = vrot.slane %v253, 1
  %v255 = vadd.f32 %v253, %v254
  %256 = vst [vmem:[%s2] sm:$0x1] %v255
  // Predicated region
  $region10: #{make_moons_forward.1} parent=0 // pred_check
    _
  $region11: #{make_moons_forward.1} parent=0 // pred_check_branch
    %258 = sbr.rel (0) target = $region13
  $region12: #{make_moons_forward.1} parent=0 // pred_region
    _
  $region13: #{make_moons_forward.1} parent=0 // pred_fallthru
    _
  // Predicated region
  $region14: #{make_moons_forward.1} parent=0 // pred_check
    _
  $region15: #{make_moons_forward.1} parent=0 // pred_check_branch
    %260 = sbr.rel (0) target = $region17
  $region16: #{make_moons_forward.1} parent=0 // pred_region
    _
  $region17: #{make_moons_forward.1} parent=0 // pred_fallthru
    _

</llo_original>
